<compile_context>
chip_gen: v7x
topology: tpu7x:2x2x1
jax: 0.10.0
libtpu: 0.0.40
codegen_flags: <defaults>
</compile_context>

<pallas_src>
import functools

import jax
import jax.numpy as jnp
from jax.experimental import pallas as pl
from jax.experimental.pallas import tpu as pltpu

LANE = 128        # lane width: embedding-dim padding
NODE_PAD = 256    # node-count padding granularity (review: not TK-sized)
_MiB = 1024 * 1024


def _round_up(x, m):
    return ((x + m - 1) // m) * m


def _vmem_limit_bytes():
    """Chip-aware scoped-VMEM budget (v5e/v6e: 128 MiB phys, v7x: 64 MiB/TC)."""
    cap = 64 * _MiB                       # conservative default (v7x per-core)
    try:
        info = pltpu.get_tpu_info()
        cap = int(getattr(info, "vmem_capacity_bytes", cap))
    except Exception:
        pass
    return min(max(cap - 8 * _MiB, 32 * _MiB), 100 * _MiB)


# ---------------------------------------------------------------------------
# Fused resident-A kernel (whole adjacency lives in VMEM for all layers).
# Runs on a single TensorCore; the 3x reduction in A HBM traffic and the
# single launch dominate for graphs small enough to qualify.
# ---------------------------------------------------------------------------
def _fused_kernel(w_ref, a_ref, x0_ref, out_ref, *, num_layers):
    """All propagation layers + weighted combination + row L2 norm.

    w_ref  : SMEM f32[L+1]          softmax-ed layer weights
    a_ref  : VMEM bf16[N, N]        normalized adjacency (A[dst, src])
    x0_ref : VMEM f32[N, D]         layer-0 embeddings (zero-padded)
    out_ref: VMEM f32[N, D]         normalized combined embeddings
    """
    x = x0_ref[...]                                   # f32
    acc = w_ref[0] * x
    for layer in range(num_layers):
        # bf16 MXU operands, f32 accumulation.
        x = jnp.dot(a_ref[...], x.astype(jnp.bfloat16),
                    preferred_element_type=jnp.float32)
        acc = acc + w_ref[layer + 1] * x
    # F.normalize(acc, dim=1): acc / max(||acc||_2, 1e-12)
    sq = jnp.sum(acc * acc, axis=1, keepdims=True)
    out_ref[...] = acc * jax.lax.rsqrt(jnp.maximum(sq, 1e-24))


def _run_fused(w, adj_bf16, x0, *, num_layers, n_pad, d_pad, vmem_limit):
    kernel = functools.partial(_fused_kernel, num_layers=num_layers)
    flops = 2 * num_layers * n_pad * n_pad * d_pad
    bytes_accessed = n_pad * n_pad * 2 + 2 * n_pad * d_pad * 4
    return pl.pallas_call(
        kernel,
        out_shape=jax.ShapeDtypeStruct((n_pad, d_pad), jnp.float32),
        in_specs=[
            pl.BlockSpec(memory_space=pltpu.SMEM),                   # weights
            pl.BlockSpec(memory_space=pltpu.MemorySpace.VMEM),       # A (resident)
            pl.BlockSpec(memory_space=pltpu.MemorySpace.VMEM),       # x0
        ],
        out_specs=pl.BlockSpec(memory_space=pltpu.MemorySpace.VMEM),
        compiler_params=pltpu.CompilerParams(vmem_limit_bytes=vmem_limit),
        cost_estimate=pl.CostEstimate(flops=flops, transcendentals=n_pad,
                                      bytes_accessed=bytes_accessed),
    )(w, adj_bf16, x0)


# ---------------------------------------------------------------------------
# Streaming per-layer kernel (A tiled through VMEM, large MXU tiles).
# ---------------------------------------------------------------------------
def _stream_layer_kernel(w_ref, a_ref, x_ref, acc_in_ref, *refs,
                         layer, last, x_resident, tk):
    """One LightGCN propagation layer, tiled over (row tiles, K tiles).

    w_ref      : SMEM f32[L+1]
    a_ref      : VMEM bf16[TM, TK]          adjacency tile (A[dst, src])
    x_ref      : VMEM bf16[N, D] (resident) or bf16[TK, D] (K slice)
    acc_in_ref : VMEM f32[TM, D]            running weighted combination
    outputs    : (x_out, acc_out) or, on the last layer, just (acc_out)
    scratch    : VMEM f32[TM, D]            K-axis matmul accumulator
    """
    if last:
        acc_out_ref, prop = refs
        x_out_ref = None
    else:
        x_out_ref, acc_out_ref, prop = refs

    k = pl.program_id(1)

    if x_resident:
        start = pl.multiple_of(k * tk, tk)
        x_blk = x_ref[pl.ds(start, tk), :]
    else:
        x_blk = x_ref[...]

    partial = jnp.dot(a_ref[...], x_blk, preferred_element_type=jnp.float32)

    @pl.when(k == 0)
    def _():
        prop[...] = partial                 # init by assignment (no zero + add)

    @pl.when(k > 0)
    def _():
        prop[...] += partial

    @pl.when(k == pl.num_programs(1) - 1)
    def _():
        x_new = prop[...]
        combined = acc_in_ref[...] + w_ref[layer + 1] * x_new
        if last:
            # F.normalize(x, dim=1) fused into the last layer's epilogue.
            sq = jnp.sum(combined * combined, axis=1, keepdims=True)
            acc_out_ref[...] = combined * jax.lax.rsqrt(jnp.maximum(sq, 1e-24))
        else:
            x_out_ref[...] = x_new.astype(x_out_ref.dtype)
            acc_out_ref[...] = combined


def _stream_plan(n_pad, d_pad, vmem_limit):
    """Pick (tm, tk, x_resident): biggest tiles that fit the VMEM budget,
    n_pad-divisible, with >=2 row tiles (v7x megacore)."""
    budget = int(vmem_limit * 0.80)
    x_resident = 2 * n_pad * d_pad * 2 <= budget // 3
    best = None
    for tm in (1024, 512, 256, 128):
        if n_pad % tm or tm > n_pad // 2:
            continue
        for tk in (2048, 1024, 512, 256):
            if n_pad % tk:
                continue
            a_buf = 2 * tm * tk * 2                                  # A, 2 bufs
            x_buf = (2 * n_pad * d_pad * 2) if x_resident else (2 * tk * d_pad * 2)
            io_buf = tm * d_pad * (2 * 4 + 2 * 2 + 2 * 4) + tm * d_pad * 4
            if a_buf + x_buf + io_buf <= budget:
                cand = (tm * tk, tm, tk)
                if best is None or cand > best:
                    best = cand
    if best is None:
        return 128, 256, False
    _, tm, tk = best
    return tm, tk, x_resident


def _propagate_layer_stream(w, adj_bf16, x_bf16, acc_f32, *, layer, last,
                            tm, tk, n_pad, d_pad, x_resident, vmem_limit):
    grid = (n_pad // tm, n_pad // tk)
    kernel = functools.partial(_stream_layer_kernel, layer=layer, last=last,
                               x_resident=x_resident, tk=tk)

    if x_resident:
        # Whole padded x resident in VMEM for the layer (constant index_map),
        # sliced with pl.ds inside the kernel -> fetched once, not per row tile.
        x_spec = pl.BlockSpec((n_pad, d_pad), lambda i, k: (0, 0))
        x_bytes = n_pad * d_pad * 2
    else:
        x_spec = pl.BlockSpec((tk, d_pad), lambda i, k: (k, 0))
        x_bytes = grid[0] * n_pad * d_pad * 2

    in_specs = [
        pl.BlockSpec(memory_space=pltpu.SMEM),                  # layer weights
        pl.BlockSpec((tm, tk), lambda i, k: (i, k)),            # A tile
        x_spec,                                                 # x^(l)
        pl.BlockSpec((tm, d_pad), lambda i, k: (i, 0)),         # acc in
    ]
    acc_out_spec = pl.BlockSpec((tm, d_pad), lambda i, k: (i, 0))
    acc_out_shape = jax.ShapeDtypeStruct((n_pad, d_pad), jnp.float32)

    if last:
        out_specs = acc_out_spec
        out_shape = acc_out_shape
        io_alias = {3: 0}                  # acc_in -> acc_out (in place)
    else:
        out_specs = [pl.BlockSpec((tm, d_pad), lambda i, k: (i, 0)),
                     acc_out_spec]
        out_shape = [jax.ShapeDtypeStruct((n_pad, d_pad), jnp.bfloat16),
                     acc_out_shape]
        io_alias = {3: 1}

    flops = 2 * n_pad * n_pad * d_pad
    bytes_accessed = (n_pad * n_pad * 2 + x_bytes
                      + n_pad * d_pad * (4 + 4 + (0 if last else 2)))

    return pl.pallas_call(
        kernel,
        grid=grid,
        in_specs=in_specs,
        out_specs=out_specs,
        out_shape=out_shape,
        scratch_shapes=[pltpu.VMEM((tm, d_pad), jnp.float32)],
        input_output_aliases=io_alias,
        compiler_params=pltpu.CompilerParams(
            dimension_semantics=("parallel", "arbitrary"),
            vmem_limit_bytes=vmem_limit),
        cost_estimate=pl.CostEstimate(
            flops=flops,
            transcendentals=n_pad if last else 0,
            bytes_accessed=bytes_accessed),
    )(w, adj_bf16, x_bf16, acc_f32)


# ---------------------------------------------------------------------------
# Adjacency build (hoisted: build ONCE per graph, reuse across forwards).
# ---------------------------------------------------------------------------
@functools.partial(jax.jit, static_argnames=("num_nodes",))
def build_normalized_adjacency(edge_index, num_nodes, edge_weight=None):
    """Dense gcn_norm (no self-loops), as in torch_geometric's LGConv,
    built directly at the padded size (pad rows/cols stay zero)."""
    n_pad = max(_round_up(num_nodes, NODE_PAD), NODE_PAD)
    src = edge_index[0]
    dst = edge_index[1]
    if edge_weight is None:
        edge_weight = jnp.ones(src.shape, dtype=jnp.float32)
    edge_weight = edge_weight.astype(jnp.float32)
    deg = jnp.zeros((num_nodes,), jnp.float32).at[dst].add(edge_weight)
    deg_inv_sqrt = jnp.where(deg > 0, jax.lax.rsqrt(deg), 0.0)
    norm = deg_inv_sqrt[src] * edge_weight * deg_inv_sqrt[dst]
    adj = jnp.zeros((n_pad, n_pad), jnp.float32)
    adj = adj.at[dst, src].add(norm)     # out[i] = sum_{(j->i)} norm * x[j]
    return adj.astype(jnp.bfloat16)


# ---------------------------------------------------------------------------
# Forward pass.
# ---------------------------------------------------------------------------
def _fits_fused(n_pad, d_pad, vmem_limit):
    a_bytes = n_pad * n_pad * 2                 # resident bf16 adjacency
    work = 8 * n_pad * d_pad * 4                # live x / acc / in / out slack
    return a_bytes + work <= int(vmem_limit * 0.70)


@functools.partial(jax.jit, static_argnames=("num_layers", "force_streaming"))
def lightgcn_forward_from_adj(embedding_weight, layer_weights, adj_bf16, *,
                              num_layers=3, force_streaming=False):
    num_nodes, emb_dim = embedding_weight.shape
    n_pad = adj_bf16.shape[0]
    d_pad = max(_round_up(emb_dim, LANE), LANE)
    vmem_limit = _vmem_limit_bytes()

    w = jax.nn.softmax(layer_weights.astype(jnp.float32))

    # Layer-0 features, zero-padded to (n_pad, d_pad).
    x0 = jnp.zeros((n_pad, d_pad), jnp.float32)
    x0 = x0.at[:num_nodes, :emb_dim].set(embedding_weight.astype(jnp.float32))

    if (not force_streaming) and _fits_fused(n_pad, d_pad, vmem_limit):
        out = _run_fused(w, adj_bf16, x0, num_layers=num_layers,
                         n_pad=n_pad, d_pad=d_pad, vmem_limit=vmem_limit)
    else:
        tm, tk, x_resident = _stream_plan(n_pad, d_pad, vmem_limit)
        acc = w[0] * x0                        # weighted combination (f32)
        x = x0.astype(jnp.bfloat16)            # propagated embeddings (bf16)
        for layer in range(num_layers):
            last = layer == num_layers - 1
            res = _propagate_layer_stream(
                w, adj_bf16, x, acc, layer=layer, last=last,
                tm=tm, tk=tk, n_pad=n_pad, d_pad=d_pad,
                x_resident=x_resident, vmem_limit=vmem_limit)
            if last:
                acc = res
            else:
                x, acc = res
        out = acc
    return out[:num_nodes, :emb_dim]


def lightgcn_forward(embedding_weight, layer_weights, edge_index,
                     edge_weight=None, *, num_layers=3, force_streaming=False):
    """Convenience one-shot wrapper (builds the adjacency then runs forward).
    For repeated inference on a fixed graph, call build_normalized_adjacency
    once and reuse it with lightgcn_forward_from_adj."""
    num_nodes = embedding_weight.shape[0]
    adj_bf16 = build_normalized_adjacency(edge_index, num_nodes=num_nodes,
                                          edge_weight=edge_weight)
    return lightgcn_forward_from_adj(embedding_weight, layer_weights, adj_bf16,
                                     num_layers=num_layers,
                                     force_streaming=force_streaming)


def lightgcn_reference(embedding_weight, layer_weights, edge_index,
                       edge_weight=None, *, num_layers=3):
    """Pure-JAX f32 reference of the same forward (sanity check)."""
    num_nodes, _ = embedding_weight.shape
    src, dst = edge_index[0], edge_index[1]
    ew = (jnp.ones(src.shape, jnp.float32)
          if edge_weight is None else edge_weight.astype(jnp.float32))
    deg = jnp.zeros((num_nodes,), jnp.float32).at[dst].add(ew)
    dis = jnp.where(deg > 0, jax.lax.rsqrt(deg), 0.0)
    norm = dis[src] * ew * dis[dst]
    adj = jnp.zeros((num_nodes, num_nodes), jnp.float32).at[dst, src].add(norm)

    w = jax.nn.softmax(layer_weights)
    x = embedding_weight
    outs = [x]
    for _ in range(num_layers):
        x = adj @ x
        outs.append(x)
    combined = jnp.sum(w[:, None, None] * jnp.stack(outs), axis=0)
    nrm = jnp.sqrt(jnp.sum(combined * combined, axis=1, keepdims=True))
    return combined / jnp.maximum(nrm, 1e-12)


if __name__ == "__main__":
    num_layers = 3

    def make_inputs(key, num_nodes, embedding_dim, num_edges):
        k_emb, k_src, k_dst = jax.random.split(key, 3)
        # nn.init.xavier_uniform_ on an (num_nodes, embedding_dim) matrix
        bound = (6.0 / (num_nodes + embedding_dim)) ** 0.5
        emb = jax.random.uniform(k_emb, (num_nodes, embedding_dim),
                                 minval=-bound, maxval=bound, dtype=jnp.float32)
        # layer_weights = ones(L+1) / (L+1)
        lw = jnp.ones((num_layers + 1,), jnp.float32) / (num_layers + 1)
        # random undirected edge_index [2, 2*num_edges]
        src = jax.random.randint(k_src, (num_edges,), 0, num_nodes, jnp.int32)
        dst = jax.random.randint(k_dst, (num_edges,), 0, num_nodes, jnp.int32)
        ei = jnp.stack([jnp.concatenate([src, dst]),
                        jnp.concatenate([dst, src])], axis=0)
        return emb, lw, ei

    key = jax.random.PRNGKey(0)
    k1, k2 = jax.random.split(key)

    # --- Test 1: small graph -> fused resident-A path (adjacency hoisted). ---
    emb, lw, ei = make_inputs(k1, num_nodes=32, embedding_dim=64, num_edges=64)
    adj = build_normalized_adjacency(ei, num_nodes=32)
    out = lightgcn_forward_from_adj(emb, lw, adj, num_layers=num_layers)
    out = jax.block_until_ready(out)
    ref = lightgcn_reference(emb, lw, ei, num_layers=num_layers)
    assert out.shape == (32, 64)
    assert jnp.allclose(out, ref, atol=3e-2, rtol=3e-2), \
        float(jnp.max(jnp.abs(out - ref)))

    # --- Test 2: larger graph, streaming path forced (multi-tile grid,
    #     resident x, aliased accumulator, fused norm epilogue). ---
    emb2, lw2, ei2 = make_inputs(k2, num_nodes=300, embedding_dim=64,
                                 num_edges=900)
    out2 = lightgcn_forward(emb2, lw2, ei2, num_layers=num_layers,
                            force_streaming=True)
    out2 = jax.block_until_ready(out2)
    ref2 = lightgcn_reference(emb2, lw2, ei2, num_layers=num_layers)
    assert out2.shape == (300, 64)
    assert jnp.allclose(out2, ref2, atol=3e-2, rtol=3e-2), \
        float(jnp.max(jnp.abs(out2 - ref2)))

    print("KERNEL_OK")
</pallas_src>

<mosaic_0001>
module attributes {stable_mosaic.version = 11 : i64} {
  func.func private @main(%arg0: i32) attributes {dimension_semantics = [#tpu.dimension_semantics<core_parallel>], iteration_bounds = array<i64: 2>, tpu.core_type = #tpu.core_type<sc_scalar_subcore>, window_params = []} {
    return
  }
}

module attributes {stable_mosaic.version = 11 : i64} {
  func.func private @main(%arg0: i32) attributes {dimension_semantics = [#tpu.dimension_semantics<core_parallel>], iteration_bounds = array<i64: 2>, tpu.core_type = #tpu.core_type<sc_scalar_subcore>, window_params = []} {
    return
  }
}

</mosaic_0001>

<llo_original>
// kernel: mul.1
$region0: #{mul.1}
  #allocation0 [shape = 's32[1]{0}', space=sflag, size = 0x4, scoped, tag = 'scoped memory for mul.1']
  %s0 = inlined_call_operand.vmem [shape: f32[128], index: 0, kind: input, shape index: {}]
  %s1 = inlined_call_operand.vmem [shape: f32[128], index: 1, kind: input, shape index: {}]
  %s2 = inlined_call_operand.vmem [shape: f32[128], index: 2, kind: output, shape index: {}]
  %v3 = vld [vmem:[%s0] sm:$0x1]
  %v4 = vld [vmem:[%s1] sm:$0x1]
  %5 = xla_tuple %v3, %v4
  %6 = xla_tuple %5
  %v7 = vmul.f32 %v3, %v4
  %8 = xla_tuple %v7
  %9 = vst [vmem:[%s2] sm:$0x1] %v7

</llo_original>
